<compile_context>
chip_gen: v6e
topology: v6e:2x2x1
jax: 0.10.0
libtpu: 0.0.40
codegen_flags: <defaults>
</compile_context>

<pallas_src>
import functools
from math import sqrt

import jax
import jax.numpy as jnp
import numpy as np
from jax import lax
from jax.experimental import pallas as pl
from jax.experimental.pallas import tpu as pltpu


def _pick_l_tile(L):
    """L-tile: full L when small, otherwise a 32-multiple tile (int8-friendly)."""
    if L <= 128:
        return L
    for t in (256, 128, 64, 32):
        if L % t == 0:
            return t
    return 128  # partial last block handled by Pallas (padded reads / masked writes)


def _attention_kernel(q_ref, k_ref, v_ref, mask_ref, ind_ref, a_ref, o_ref, *,
                      scale, H, E, D, l_tile):
    # q_ref: (Lt, H*E)   k_ref: (S, H*E)   v_ref: (S, H*D)
    # mask_ref: (H, Lt, S) int8 (nonzero == masked)
    # ind_ref: (Lt, 1) f32 (1.0 where global row index is in no_tf_genes_index)
    # a_ref: (H, Lt, S)  o_ref: (Lt, H*D)
    li = pl.program_id(2)

    # Fold softmax scale into Q once for all heads (one whole-block VPU multiply).
    q = q_ref[...] * jnp.float32(scale)
    k = k_ref[...]
    v = v_ref[...]
    ind = ind_ref[...]                      # (Lt, 1)

    Lt = a_ref.shape[1]
    S = a_ref.shape[2]

    # Forced-diagonal indicator built on the fly (VPU iota + compare), hoisted
    # out of the head loop; no dense (L,S) f32 input needed.  Global row index
    # accounts for the L tiling.
    rows = lax.broadcasted_iota(jnp.int32, (Lt, S), 0) + li * l_tile
    cols = lax.broadcasted_iota(jnp.int32, (Lt, S), 1)
    force = jnp.logical_and(rows == cols, ind > 0.5)   # (Lt, S)

    neg_inf = jnp.float32(-jnp.inf)
    forced_val = jnp.float32(scale)          # scale * 1.0 (PyTorch sets score=1.0)

    outs = []
    for h in range(H):                       # H is small & static -> unrolled
        qh = q[:, h * E:(h + 1) * E]             # (Lt, E), already scaled
        kh = k[:, h * E:(h + 1) * E]             # (S, E)
        vh = v[:, h * D:(h + 1) * D]             # (S, D)
        mh = mask_ref[h]                         # (Lt, S) int8

        # scores = (scale * Q) K^T   (MXU, f32 accumulation)
        s = lax.dot_general(qh, kh, (((1,), (1,)), ((), ())),
                            preferred_element_type=jnp.float32)
        # masked_fill_(attn_mask, -inf) then forced diagonal -> scale (force wins,
        # matching the PyTorch statement order).
        s = jnp.where(force, forced_val, jnp.where(mh != 0, neg_inf, s))

        # softmax over S (math in f32, cast only on store)
        m = jnp.max(s, axis=-1, keepdims=True)
        e = jnp.exp(s - m)
        den = jnp.sum(e, axis=-1, keepdims=True)
        attn = e * pl.reciprocal(den, approx=False)

        # TODO(synk): attention dropout is identity here (eval mode); training-mode
        # dropout would use pltpu.prng_seed / pltpu.stateful_bernoulli.
        a_ref[h] = attn.astype(a_ref.dtype)      # lane-dense (Lt, S) store

        out_h = lax.dot_general(attn, vh, (((1,), (0,)), ((), ())),
                                preferred_element_type=jnp.float32)
        outs.append(out_h)

    # Single lane-dense (Lt, H*D) store covering all heads.
    o_ref[...] = jnp.concatenate(outs, axis=-1).astype(o_ref.dtype)


def full_attention(queries, keys, values, attn_mask, no_tf_genes_index,
                   attention_dropout=0.0):
    """Pallas implementation of FullAttention.forward (eval-mode dropout)."""
    B, T, L, H, E = queries.shape
    _, _, S, _, D = values.shape
    scale = 1.0 / sqrt(E)

    # Free reshapes: merge contiguous trailing (H,E)/(H,D) dims -> no HBM
    # transpose passes outside the kernel; DMAs stay large & contiguous.
    q2 = queries.reshape(B, T, L, H * E)
    k2 = keys.reshape(B, T, S, H * E)
    v2 = values.reshape(B, T, S, H * D)

    # int8 mask (largest input stream): 4x smaller than a float32 cast.
    mask_i8 = attn_mask.astype(jnp.int8)

    # (L, 1) per-row indicator of forced-diagonal rows (tiny; replaces (L,S) f32).
    ind = jnp.zeros((L, 1), dtype=jnp.float32)
    if no_tf_genes_index is not None:
        idx = jnp.asarray(no_tf_genes_index, dtype=jnp.int32)
        ind = ind.at[idx, 0].set(1.0)

    l_tile = _pick_l_tile(L)
    n_l = pl.cdiv(L, l_tile)
    grid = (B, T, n_l)

    kernel = functools.partial(_attention_kernel, scale=scale, H=H, E=E, D=D,
                               l_tile=l_tile)

    a_shape = jax.ShapeDtypeStruct((B, T, H, L, S), queries.dtype)
    o_shape = jax.ShapeDtypeStruct((B, T, L, H * D), queries.dtype)

    attn, out = pl.pallas_call(
        kernel,
        out_shape=(a_shape, o_shape),
        grid_spec=pltpu.PrefetchScalarGridSpec(
            num_scalar_prefetch=0,
            grid=grid,
            in_specs=[
                # Q: per (b,t) L-tile, all heads merged on the lane axis.
                pl.BlockSpec((None, None, l_tile, H * E),
                             lambda b, t, li: (b, t, li, 0)),
                # K, V: independent of the innermost L axis -> stay VMEM-resident.
                pl.BlockSpec((None, None, S, H * E),
                             lambda b, t, li: (b, t, 0, 0)),
                pl.BlockSpec((None, None, S, H * D),
                             lambda b, t, li: (b, t, 0, 0)),
                # int8 mask: all heads for this L-tile.
                pl.BlockSpec((None, None, H, l_tile, S),
                             lambda b, t, li: (b, t, 0, li, 0)),
                # (L,1) forced-diagonal row indicator.
                pl.BlockSpec((l_tile, 1), lambda b, t, li: (li, 0)),
            ],
            out_specs=[
                pl.BlockSpec((None, None, H, l_tile, S),
                             lambda b, t, li: (b, t, 0, li, 0)),
                pl.BlockSpec((None, None, l_tile, H * D),
                             lambda b, t, li: (b, t, li, 0)),
            ],
        ),
        compiler_params=pltpu.CompilerParams(
            dimension_semantics=("parallel", "parallel", "parallel"),
            vmem_limit_bytes=48 * 1024 * 1024,  # headroom under v7x 64 MiB physical
        ),
    )(q2, k2, v2, mask_i8, ind)

    V = out.reshape(B, T, L, H, D)   # free reshape (split contiguous trailing dim)
    return V, attn


def _reference(queries, keys, values, attn_mask, no_tf_genes_index):
    B, T, L, H, E = queries.shape
    scale = 1.0 / sqrt(E)
    scores = jnp.einsum('btlhe,btshe->bthls', queries, keys)
    scores = jnp.where(attn_mask, -jnp.inf, scores)
    if no_tf_genes_index is not None:
        idx = jnp.asarray(no_tf_genes_index, dtype=jnp.int32)
        scores = scores.at[:, :, :, idx, idx].set(1.0)
    attn = jax.nn.softmax(scale * scores, axis=-1)
    V = jnp.einsum('bthls,btshd->btlhd', attn, values)
    return V, attn


if __name__ == "__main__":
    key = jax.random.PRNGKey(0)
    B, T, L, S, H, E, D = 2, 2, 8, 8, 2, 16, 16

    kq, kk, kv, km = jax.random.split(key, 4)
    queries = jax.random.normal(kq, (B, T, L, H, E), dtype=jnp.float32)
    keys = jax.random.normal(kk, (B, T, S, H, E), dtype=jnp.float32)
    values = jax.random.normal(kv, (B, T, S, H, D), dtype=jnp.float32)

    # Random boolean mask; keep the diagonal unmasked so no row is fully -inf.
    attn_mask = jax.random.uniform(km, (B, T, H, L, S)) > 0.7
    eye = jnp.eye(L, S, dtype=bool)[None, None, None]
    attn_mask = jnp.where(eye, False, attn_mask)

    no_tf_genes_index = [1, 3, 5]

    V, A = full_attention(queries, keys, values, attn_mask, no_tf_genes_index,
                          attention_dropout=0.1)
    V = jax.block_until_ready(V)
    A = jax.block_until_ready(A)

    V_ref, A_ref = _reference(queries, keys, values, attn_mask, no_tf_genes_index)
    np.testing.assert_allclose(np.asarray(A), np.asarray(A_ref), rtol=1e-5, atol=1e-5)
    np.testing.assert_allclose(np.asarray(V), np.asarray(V_ref), rtol=1e-5, atol=1e-5)

    print("KERNEL_OK")
</pallas_src>

<mosaic_0001>
module attributes {stable_mosaic.version = 11 : i64} {
  func.func @_attention_kernel(%arg0: i32, %arg1: i32, %arg2: i32, %arg3: memref<1x1x8x32xf32, #tpu.memory_space<vmem>>, %arg4: memref<1x1x8x32xf32, #tpu.memory_space<vmem>>, %arg5: memref<1x1x8x32xf32, #tpu.memory_space<vmem>>, %arg6: memref<1x1x2x8x8xi8, #tpu.memory_space<vmem>>, %arg7: memref<8x1xf32, #tpu.memory_space<vmem>>, %arg8: memref<1x1x2x8x8xf32, #tpu.memory_space<vmem>>, %arg9: memref<1x1x8x32xf32, #tpu.memory_space<vmem>>) attributes {dimension_semantics = [#tpu.dimension_semantics<parallel>, #tpu.dimension_semantics<parallel>, #tpu.dimension_semantics<parallel>], iteration_bounds = array<i64: 2, 2, 1>, scalar_prefetch = 0 : i64, scratch_operands = 0 : i64, tpu.core_type = #tpu.core_type<tc>, window_params = [{transform_indices = @transform_0, window_bounds = array<i64: 1, 1, 8, 32>}, {transform_indices = @transform_1, window_bounds = array<i64: 1, 1, 8, 32>}, {transform_indices = @transform_2, window_bounds = array<i64: 1, 1, 8, 32>}, {transform_indices = @transform_3, window_bounds = array<i64: 1, 1, 2, 8, 8>}, {transform_indices = @transform_4, window_bounds = array<i64: 8, 1>}, {transform_indices = @transform_5, window_bounds = array<i64: 1, 1, 2, 8, 8>}, {transform_indices = @transform_6, window_bounds = array<i64: 1, 1, 8, 32>}]} {
    %c0 = arith.constant 0 : index
    %c0_0 = arith.constant 0 : index
    %c0_1 = arith.constant 0 : index
    %c0_2 = arith.constant 0 : index
    %0 = vector.load %arg3[%c0, %c0_0, %c0_1, %c0_2] : memref<1x1x8x32xf32, #tpu.memory_space<vmem>>, vector<1x1x8x32xf32>
    %1 = vector.shape_cast %0 : vector<1x1x8x32xf32> to vector<8x32xf32>
    %cst = arith.constant 2.500000e-01 : f32
    %2 = vector.broadcast %cst : f32 to vector<8x32xf32>
    %3 = arith.mulf %1, %2 : vector<8x32xf32>
    %c0_3 = arith.constant 0 : index
    %c0_4 = arith.constant 0 : index
    %c0_5 = arith.constant 0 : index
    %c0_6 = arith.constant 0 : index
    %4 = vector.load %arg4[%c0_3, %c0_4, %c0_5, %c0_6] : memref<1x1x8x32xf32, #tpu.memory_space<vmem>>, vector<1x1x8x32xf32>
    %5 = vector.shape_cast %4 : vector<1x1x8x32xf32> to vector<8x32xf32>
    %c0_7 = arith.constant 0 : index
    %c0_8 = arith.constant 0 : index
    %c0_9 = arith.constant 0 : index
    %c0_10 = arith.constant 0 : index
    %6 = vector.load %arg5[%c0_7, %c0_8, %c0_9, %c0_10] : memref<1x1x8x32xf32, #tpu.memory_space<vmem>>, vector<1x1x8x32xf32>
    %7 = vector.shape_cast %6 : vector<1x1x8x32xf32> to vector<8x32xf32>
    %c0_11 = arith.constant 0 : index
    %c0_12 = arith.constant 0 : index
    %8 = vector.load %arg7[%c0_11, %c0_12] : memref<8x1xf32, #tpu.memory_space<vmem>>, vector<8x1xf32>
    %9 = tpu.iota {dimensions = array<i32: 0>} : vector<8x8xi32>
    %c8_i32 = arith.constant 8 : i32
    %10 = arith.muli %arg2, %c8_i32 : i32
    %11 = vector.broadcast %10 : i32 to vector<8x8xi32>
    %12 = arith.addi %9, %11 : vector<8x8xi32>
    %13 = tpu.iota {dimensions = array<i32: 1>} : vector<8x8xi32>
    %14 = arith.cmpi eq, %12, %13 : vector<8x8xi32>
    %cst_13 = arith.constant 5.000000e-01 : f32
    %15 = vector.broadcast %cst_13 : f32 to vector<8x1xf32>
    %16 = arith.cmpf ogt, %8, %15 : vector<8x1xf32>
    %17 = vector.broadcast %16 : vector<8x1xi1> to vector<8x8xi1>
    %18 = arith.andi %14, %17 : vector<8x8xi1>
    %19 = vector.extract_strided_slice %3 {offsets = [0, 0], sizes = [8, 16], strides = [1, 1]} : vector<8x32xf32> to vector<8x16xf32>
    %20 = vector.extract_strided_slice %5 {offsets = [0, 0], sizes = [8, 16], strides = [1, 1]} : vector<8x32xf32> to vector<8x16xf32>
    %21 = vector.extract_strided_slice %7 {offsets = [0, 0], sizes = [8, 16], strides = [1, 1]} : vector<8x32xf32> to vector<8x16xf32>
    %c0_14 = arith.constant 0 : index
    %c0_15 = arith.constant 0 : index
    %c0_16 = arith.constant 0 : index
    %c0_17 = arith.constant 0 : index
    %c0_18 = arith.constant 0 : index
    %22 = vector.load %arg6[%c0_14, %c0_15, %c0_16, %c0_17, %c0_18] : memref<1x1x2x8x8xi8, #tpu.memory_space<vmem>>, vector<1x1x1x8x8xi8>
    %23 = vector.shape_cast %22 : vector<1x1x1x8x8xi8> to vector<8x8xi8>
    %cst_19 = arith.constant dense<0.000000e+00> : vector<8x8xf32>
    %24 = tpu.matmul %19, %20, %cst_19 {dimension_numbers = #tpu.dot_dimension_numbers<[1], [1], [0], [0], [0, 0, 1, 0], [], []>} : vector<8x16xf32>, vector<8x16xf32>, vector<8x8xf32> -> vector<8x8xf32>
    %c0_i8 = arith.constant 0 : i8
    %25 = vector.broadcast %c0_i8 : i8 to vector<8x8xi8>
    %26 = arith.cmpi ne, %23, %25 : vector<8x8xi8>
    %cst_20 = arith.constant 0xFF800000 : f32
    %27 = vector.broadcast %cst_20 : f32 to vector<8x8xf32>
    %28 = arith.select %26, %27, %24 : vector<8x8xi1>, vector<8x8xf32>
    %cst_21 = arith.constant 2.500000e-01 : f32
    %29 = vector.broadcast %cst_21 : f32 to vector<8x8xf32>
    %30 = arith.select %18, %29, %28 : vector<8x8xi1>, vector<8x8xf32>
    %cst_22 = arith.constant dense<0xFF800000> : vector<8xf32>
    %31 = vector.multi_reduction <maximumf>, %30, %cst_22 [1] : vector<8x8xf32> to vector<8xf32>
    %32 = vector.shape_cast %31 : vector<8xf32> to vector<8x1xf32>
    %33 = vector.broadcast %32 : vector<8x1xf32> to vector<8x8xf32>
    %34 = arith.subf %30, %33 : vector<8x8xf32>
    %35 = math.exp %34 : vector<8x8xf32>
    %cst_23 = arith.constant dense<0.000000e+00> : vector<8xf32>
    %36 = vector.multi_reduction <add>, %35, %cst_23 [1] : vector<8x8xf32> to vector<8xf32>
    %37 = vector.shape_cast %36 : vector<8xf32> to vector<8x1xf32>
    %38 = tpu.reciprocal %37 : vector<8x1xf32> -> vector<8x1xf32>
    %39 = vector.broadcast %38 : vector<8x1xf32> to vector<8x8xf32>
    %40 = arith.mulf %35, %39 : vector<8x8xf32>
    %c0_24 = arith.constant 0 : index
    %c0_25 = arith.constant 0 : index
    %c0_26 = arith.constant 0 : index
    %c0_27 = arith.constant 0 : index
    %c0_28 = arith.constant 0 : index
    %41 = vector.load %arg8[%c0_24, %c0_25, %c0_26, %c0_27, %c0_28] : memref<1x1x2x8x8xf32, #tpu.memory_space<vmem>>, vector<1x1x1x8x8xf32>
    %42 = vector.shape_cast %41 : vector<1x1x1x8x8xf32> to vector<8x8xf32>
    %43 = vector.shape_cast %40 : vector<8x8xf32> to vector<1x1x1x8x8xf32>
    tpu.vector_store %arg8[%c0_24, %c0_25, %c0_26, %c0_27, %c0_28], %43 {strides = array<i32>} : memref<1x1x2x8x8xf32, #tpu.memory_space<vmem>>, vector<1x1x1x8x8xf32>,
    %cst_29 = arith.constant dense<0.000000e+00> : vector<8x16xf32>
    %44 = tpu.matmul %40, %21, %cst_29 {dimension_numbers = #tpu.dot_dimension_numbers<[1], [0], [0], [1], [0, 0, 1, 1], [], []>} : vector<8x8xf32>, vector<8x16xf32>, vector<8x16xf32> -> vector<8x16xf32>
    %45 = vector.extract_strided_slice %3 {offsets = [0, 16], sizes = [8, 16], strides = [1, 1]} : vector<8x32xf32> to vector<8x16xf32>
    %46 = vector.extract_strided_slice %5 {offsets = [0, 16], sizes = [8, 16], strides = [1, 1]} : vector<8x32xf32> to vector<8x16xf32>
    %47 = vector.extract_strided_slice %7 {offsets = [0, 16], sizes = [8, 16], strides = [1, 1]} : vector<8x32xf32> to vector<8x16xf32>
    %c0_30 = arith.constant 0 : index
    %c0_31 = arith.constant 0 : index
    %c1 = arith.constant 1 : index
    %c0_32 = arith.constant 0 : index
    %c0_33 = arith.constant 0 : index
    %48 = vector.load %arg6[%c0_30, %c0_31, %c1, %c0_32, %c0_33] : memref<1x1x2x8x8xi8, #tpu.memory_space<vmem>>, vector<1x1x1x8x8xi8>
    %49 = vector.shape_cast %48 : vector<1x1x1x8x8xi8> to vector<8x8xi8>
    %cst_34 = arith.constant dense<0.000000e+00> : vector<8x8xf32>
    %50 = tpu.matmul %45, %46, %cst_34 {dimension_numbers = #tpu.dot_dimension_numbers<[1], [1], [0], [0], [0, 0, 1, 0], [], []>} : vector<8x16xf32>, vector<8x16xf32>, vector<8x8xf32> -> vector<8x8xf32>
    %c0_i8_35 = arith.constant 0 : i8
    %51 = vector.broadcast %c0_i8_35 : i8 to vector<8x8xi8>
    %52 = arith.cmpi ne, %49, %51 : vector<8x8xi8>
    %cst_36 = arith.constant 0xFF800000 : f32
    %53 = vector.broadcast %cst_36 : f32 to vector<8x8xf32>
    %54 = arith.select %52, %53, %50 : vector<8x8xi1>, vector<8x8xf32>
    %cst_37 = arith.constant 2.500000e-01 : f32
    %55 = vector.broadcast %cst_37 : f32 to vector<8x8xf32>
    %56 = arith.select %18, %55, %54 : vector<8x8xi1>, vector<8x8xf32>
    %cst_38 = arith.constant dense<0xFF800000> : vector<8xf32>
    %57 = vector.multi_reduction <maximumf>, %56, %cst_38 [1] : vector<8x8xf32> to vector<8xf32>
    %58 = vector.shape_cast %57 : vector<8xf32> to vector<8x1xf32>
    %59 = vector.broadcast %58 : vector<8x1xf32> to vector<8x8xf32>
    %60 = arith.subf %56, %59 : vector<8x8xf32>
    %61 = math.exp %60 : vector<8x8xf32>
    %cst_39 = arith.constant dense<0.000000e+00> : vector<8xf32>
    %62 = vector.multi_reduction <add>, %61, %cst_39 [1] : vector<8x8xf32> to vector<8xf32>
    %63 = vector.shape_cast %62 : vector<8xf32> to vector<8x1xf32>
    %64 = tpu.reciprocal %63 : vector<8x1xf32> -> vector<8x1xf32>
    %65 = vector.broadcast %64 : vector<8x1xf32> to vector<8x8xf32>
    %66 = arith.mulf %61, %65 : vector<8x8xf32>
    %c0_40 = arith.constant 0 : index
    %c0_41 = arith.constant 0 : index
    %c1_42 = arith.constant 1 : index
    %c0_43 = arith.constant 0 : index
    %c0_44 = arith.constant 0 : index
    %67 = vector.load %arg8[%c0_40, %c0_41, %c1_42, %c0_43, %c0_44] : memref<1x1x2x8x8xf32, #tpu.memory_space<vmem>>, vector<1x1x1x8x8xf32>
    %68 = vector.shape_cast %67 : vector<1x1x1x8x8xf32> to vector<8x8xf32>
    %69 = vector.shape_cast %66 : vector<8x8xf32> to vector<1x1x1x8x8xf32>
    tpu.vector_store %arg8[%c0_40, %c0_41, %c1_42, %c0_43, %c0_44], %69 {strides = array<i32>} : memref<1x1x2x8x8xf32, #tpu.memory_space<vmem>>, vector<1x1x1x8x8xf32>,
    %cst_45 = arith.constant dense<0.000000e+00> : vector<8x16xf32>
    %70 = tpu.matmul %66, %47, %cst_45 {dimension_numbers = #tpu.dot_dimension_numbers<[1], [0], [0], [1], [0, 0, 1, 1], [], []>} : vector<8x8xf32>, vector<8x16xf32>, vector<8x16xf32> -> vector<8x16xf32>
    %71 = tpu.concatenate %44, %70 in 1 : vector<8x16xf32>, vector<8x16xf32> -> vector<8x32xf32>
    %c0_46 = arith.constant 0 : index
    %c0_47 = arith.constant 0 : index
    %c0_48 = arith.constant 0 : index
    %c0_49 = arith.constant 0 : index
    %72 = vector.load %arg9[%c0_46, %c0_47, %c0_48, %c0_49] : memref<1x1x8x32xf32, #tpu.memory_space<vmem>>, vector<1x1x8x32xf32>
    %73 = vector.shape_cast %72 : vector<1x1x8x32xf32> to vector<8x32xf32>
    %74 = vector.shape_cast %71 : vector<8x32xf32> to vector<1x1x8x32xf32>
    tpu.vector_store %arg9[%c0_46, %c0_47, %c0_48, %c0_49], %74 {strides = array<i32>} : memref<1x1x8x32xf32, #tpu.memory_space<vmem>>, vector<1x1x8x32xf32>,
    return
  }
  func.func @transform_0(%arg0: i32, %arg1: i32, %arg2: i32) -> (i32, i32, i32, i32) {
    %c0_i32 = arith.constant 0 : i32
    %c0_i32_0 = arith.constant 0 : i32
    return %arg0, %arg1, %arg2, %c0_i32 : i32, i32, i32, i32
  }
  func.func @transform_1(%arg0: i32, %arg1: i32, %arg2: i32) -> (i32, i32, i32, i32) {
    %c0_i32 = arith.constant 0 : i32
    %c0_i32_0 = arith.constant 0 : i32
    %c0_i32_1 = arith.constant 0 : i32
    return %arg0, %arg1, %c0_i32, %c0_i32_0 : i32, i32, i32, i32
  }
  func.func @transform_2(%arg0: i32, %arg1: i32, %arg2: i32) -> (i32, i32, i32, i32) {
    %c0_i32 = arith.constant 0 : i32
    %c0_i32_0 = arith.constant 0 : i32
    %c0_i32_1 = arith.constant 0 : i32
    return %arg0, %arg1, %c0_i32, %c0_i32_0 : i32, i32, i32, i32
  }
  func.func @transform_3(%arg0: i32, %arg1: i32, %arg2: i32) -> (i32, i32, i32, i32, i32) {
    %c0_i32 = arith.constant 0 : i32
    %c0_i32_0 = arith.constant 0 : i32
    %c0_i32_1 = arith.constant 0 : i32
    return %arg0, %arg1, %c0_i32, %arg2, %c0_i32_0 : i32, i32, i32, i32, i32
  }
  func.func @transform_4(%arg0: i32, %arg1: i32, %arg2: i32) -> (i32, i32) {
    %c0_i32 = arith.constant 0 : i32
    %c0_i32_0 = arith.constant 0 : i32
    return %arg2, %c0_i32 : i32, i32
  }
  func.func @transform_5(%arg0: i32, %arg1: i32, %arg2: i32) -> (i32, i32, i32, i32, i32) {
    %c0_i32 = arith.constant 0 : i32
    %c0_i32_0 = arith.constant 0 : i32
    %c0_i32_1 = arith.constant 0 : i32
    return %arg0, %arg1, %c0_i32, %arg2, %c0_i32_0 : i32, i32, i32, i32, i32
  }
  func.func @transform_6(%arg0: i32, %arg1: i32, %arg2: i32) -> (i32, i32, i32, i32) {
    %c0_i32 = arith.constant 0 : i32
    %c0_i32_0 = arith.constant 0 : i32
    return %arg0, %arg1, %arg2, %c0_i32 : i32, i32, i32, i32
  }
}

</mosaic_0001>

<llo_original>
// kernel: tpu_custom_call.1
$region0: #{tpu_custom_call.1}
  #allocation0 [shape = 'u32[]', space=smem, size = 0x4, offset = 0x4, fixed_abs, tag = 'smem constant byte address 0x4 - core index']
  #allocation1 [shape = 'u32[144,128]{1,0:T(1,128)}', space=vmem, size = 0x12000, scoped, tag = 'internal scratch']
  %s0 = inlined_call_operand.hbm [shape: f32[2,2,8,32], index: 0, kind: input, shape index: {}]
  %s1 = inlined_call_operand.hbm [shape: f32[2,2,8,32], index: 1, kind: input, shape index: {}]
  %s2 = inlined_call_operand.hbm [shape: f32[2,2,8,32], index: 2, kind: input, shape index: {}]
  %s3 = inlined_call_operand.hbm [shape: s8[2,2,2,8,8], index: 3, kind: input, shape index: {}]
  %s4 = inlined_call_operand.vmem [shape: f32[8,1], index: 4, kind: input, shape index: {}]
  %s5 = inlined_call_operand.hbm [shape: f32[2,2,2,8,8], index: 5, kind: output, shape index: {0}]
  %s6 = inlined_call_operand.hbm [shape: f32[2,2,8,32], index: 6, kind: output, shape index: {1}]
  %7 = xla_tuple %s5, %s6
  %s8 = sld [smem:[#allocation0]]
  $region77: #{tpu_custom_call.1} parent=0
    _
  %s10 = ssub.s32 1, %s8
  %s11 = scalar_select 0, %s10, %s8
  $region1: #{tpu_custom_call.1} parent=0
    #allocation2 [shape = 'u8[8192]{0}', space=vmem, size = 0x2000, scoped, tag = 'input window, operand 0']
    #allocation3 [shape = 's32[2]{0}', space=sflag, size = 0x8, scoped, tag = 'scoped memory for tpu_custom_call.1']
    #allocation4 [shape = 's32[2]{0}', space=sflag, size = 0x8, scoped, tag = 'scoped memory for tpu_custom_call.1']
    #allocation5 [shape = 'u8[8192]{0}', space=vmem, size = 0x2000, scoped, tag = 'input window, operand 1']
    #allocation6 [shape = 's32[2]{0}', space=sflag, size = 0x8, scoped, tag = 'scoped memory for tpu_custom_call.1']
    #allocation7 [shape = 'u8[8192]{0}', space=vmem, size = 0x2000, scoped, tag = 'input window, operand 2']
    #allocation8 [shape = 'u8[4096]{0}', space=vmem, size = 0x1000, scoped, tag = 'input window, operand 3']
    #allocation9 [shape = 's32[2]{0}', space=sflag, size = 0x8, scoped, tag = 'scoped memory for tpu_custom_call.1']
    #allocation10 [shape = 'u8[16384]{0}', space=vmem, size = 0x4000, scoped, tag = 'output window, operand 0']
    #allocation11 [shape = 'u8[8192]{0}', space=vmem, size = 0x2000, scoped, tag = 'output window, operand 1']
    #allocation12 [shape = 's32[2]{0}', space=sflag, size = 0x8, scoped, tag = 'scoped memory for tpu_custom_call.1']
    %12 = vsyncpa [#allocation3], 0
    %s13 = scalar_lea.sflag [#allocation3], 1
    %14 = vsyncpa %s13, 0
    %15 = vsyncpa [#allocation6], 0
    %s16 = scalar_lea.sflag [#allocation6], 1
    %17 = vsyncpa %s16, 0
    %18 = vsyncpa [#allocation9], 0
    %s19 = scalar_lea.sflag [#allocation9], 1
    %20 = vsyncpa %s19, 0
    %21 = vsyncpa [#allocation4], 0
    %s22 = scalar_lea.sflag [#allocation4], 1
    %23 = vsyncpa %s22, 0
    %24 = vsyncpa [#allocation12], 0
    %s25 = scalar_lea.sflag [#allocation12], 1
    %26 = vsyncpa %s25, 0
    loop: start=0, step=1, limit=6
    $region2: #{tpu_custom_call.1} parent=1 // loop_pre_header
      _
    $region3: #{tpu_custom_call.1} parent=1 // loop_header
      %s28 = sphi 0, %s32
      %p29 = scmp.ge.s32.totalorder %s28, 6
      %s35 = sphi 0, %s54
      %s36 = sphi 0, %s50
      %s37 = sphi 0, %s46
      %s38 = sphi 0, %s35
      %s39 = sphi 0, %s36
      %s40 = sphi 0, %s37
      %s41 = sphi 0, %s38
      %s42 = sphi 0, %s39
      %s43 = sphi 0, %s40
      %s61 = sphi 0, %s63
      %s64 = sphi 0, %s61
      %s65 = sphi 0, %s64
      %s81 = sphi 0, %s65
      %s89 = sphi 0, %s91
      %s92 = sphi 0, %s89
      %s93 = sphi 0, %s92
      %s109 = sphi 0, %s93
      %s117 = sphi 0, %s119
      %s120 = sphi 0, %s117
      %s121 = sphi 0, %s120
      %s137 = sphi 0, %s121
      %s147 = sphi 0, %s149
      %s150 = sphi 0, %s147
      %s151 = sphi 0, %s150
      %s167 = sphi 0, %s151
      %s173 = sphi 0, %s175
      %s176 = sphi 0, %s173
      %s177 = sphi 0, %s176
      %s193 = sphi 0, %s177
      %s203 = sphi 0, %s205
      %s206 = sphi 0, %s203
      %s207 = sphi 0, %s206
      %s223 = sphi 0, %s207
      %s233 = sphi 0, %s235
      %s236 = sphi 0, %s233
      %s237 = sphi 0, %s236
      %s253 = sphi 0, %s237
    $region4: #{tpu_custom_call.1} parent=1 // loop_header_branch
      %31 = sbr.rel (%p29) target = $region8
    $region5: #{tpu_custom_call.1} parent=1 // loop_body
      %s33 = ssub.s32 %s28, 1
      %s34 = ssub.s32 %s28, 2
      %s44 = sadd.s32 1, %s37
      %p45 = scmp.ge.s32.totalorder %s44, 1
      %s46 = scalar_select %p45, 0, %s44
      %s47 = sadd.s32 1, %s36
      %s48 = scalar_select %p45, %s47, %s36
      %p49 = scmp.ge.s32.totalorder %s48, 2
      %s50 = scalar_select %p49, 0, %s48
      %s51 = sadd.s32 1, %s35
      %s52 = scalar_select %p49, %s51, %s35
      %p53 = scmp.ge.s32.totalorder %s52, 2
      %s54 = scalar_select %p53, 0, %s52
      %s55 = ssub.s32 %s35, %s54
      %s56 = ssub.s32 %s36, %s50
      %s57 = sor.u32 %s55, %s56
      %s58 = ssub.s32 %s37, %s46
      %s59 = sor.u32 %s57, %s58
      %p60 = scmp.eq.s32.totalorder %s59, 0
      %s62 = sadd.s32 %s61, 1
      %s63 = scalar_select %p60, %s61, %s62
      %p66 = pneg %p60
      %p67 = scmp.eq.s32.totalorder %s28, 3
      %p68 = por %p66, %p67
      %p69 = scmp.ne.s32.totalorder %s61, %s64
      %p70 = scmp.eq.s32.totalorder %s28, 0
      %p71 = por %p69, %p70
      %p72 = scmp.ne.s32.totalorder %s61, %s64
      %p73 = scmp.eq.s32.totalorder %s33, 3
      %p74 = por %p72, %p73
      %p75 = scmp.ne.s32.totalorder %s64, %s65
      %p76 = scmp.eq.s32.totalorder %s33, 0
      %p77 = por %p75, %p76
      %p78 = scmp.ne.s32.totalorder %s64, %s65
      %p79 = scmp.eq.s32.totalorder %s34, 3
      %p80 = por %p78, %p79
      %p82 = scmp.ne.s32.totalorder %s65, %s81
      %p83 = scmp.eq.s32.totalorder %s34, 0
      %p84 = por %p82, %p83
      %s85 = ssub.s32 %s35, %s54
      %s86 = ssub.s32 %s36, %s50
      %s87 = sor.u32 %s85, %s86
      %p88 = scmp.eq.s32.totalorder %s87, 0
      %s90 = sadd.s32 %s89, 1
      %s91 = scalar_select %p88, %s89, %s90
      %p94 = pneg %p88
      %p95 = scmp.eq.s32.totalorder %s28, 3
      %p96 = por %p94, %p95
      %p97 = scmp.ne.s32.totalorder %s89, %s92
      %p98 = scmp.eq.s32.totalorder %s28, 0
      %p99 = por %p97, %p98
      %p100 = scmp.ne.s32.totalorder %s89, %s92
      %p101 = scmp.eq.s32.totalorder %s33, 3
      %p102 = por %p100, %p101
      %p103 = scmp.ne.s32.totalorder %s92, %s93
      %p104 = scmp.eq.s32.totalorder %s33, 0
      %p105 = por %p103, %p104
      %p106 = scmp.ne.s32.totalorder %s92, %s93
      %p107 = scmp.eq.s32.totalorder %s34, 3
      %p108 = por %p106, %p107
      %p110 = scmp.ne.s32.totalorder %s93, %s109
      %p111 = scmp.eq.s32.totalorder %s34, 0
      %p112 = por %p110, %p111
      %s113 = ssub.s32 %s35, %s54
      %s114 = ssub.s32 %s36, %s50
      %s115 = sor.u32 %s113, %s114
      %p116 = scmp.eq.s32.totalorder %s115, 0
      %s118 = sadd.s32 %s117, 1
      %s119 = scalar_select %p116, %s117, %s118
      %p122 = pneg %p116
      %p123 = scmp.eq.s32.totalorder %s28, 3
      %p124 = por %p122, %p123
      %p125 = scmp.ne.s32.totalorder %s117, %s120
      %p126 = scmp.eq.s32.totalorder %s28, 0
      %p127 = por %p125, %p126
      %p128 = scmp.ne.s32.totalorder %s117, %s120
      %p129 = scmp.eq.s32.totalorder %s33, 3
      %p130 = por %p128, %p129
      %p131 = scmp.ne.s32.totalorder %s120, %s121
      %p132 = scmp.eq.s32.totalorder %s33, 0
      %p133 = por %p131, %p132
      %p134 = scmp.ne.s32.totalorder %s120, %s121
      %p135 = scmp.eq.s32.totalorder %s34, 3
      %p136 = por %p134, %p135
      %p138 = scmp.ne.s32.totalorder %s121, %s137
      %p139 = scmp.eq.s32.totalorder %s34, 0
      %p140 = por %p138, %p139
      %s141 = ssub.s32 %s35, %s54
      %s142 = ssub.s32 %s36, %s50
      %s143 = sor.u32 %s141, %s142
      %s144 = ssub.s32 %s37, %s46
      %s145 = sor.u32 %s143, %s144
      %p146 = scmp.eq.s32.totalorder %s145, 0
      %s148 = sadd.s32 %s147, 1
      %s149 = scalar_select %p146, %s147, %s148
      %p152 = pneg %p146
      %p153 = scmp.eq.s32.totalorder %s28, 3
      %p154 = por %p152, %p153
      %p155 = scmp.ne.s32.totalorder %s147, %s150
      %p156 = scmp.eq.s32.totalorder %s28, 0
      %p157 = por %p155, %p156
      %p158 = scmp.ne.s32.totalorder %s147, %s150
      %p159 = scmp.eq.s32.totalorder %s33, 3
      %p160 = por %p158, %p159
      %p161 = scmp.ne.s32.totalorder %s150, %s151
      %p162 = scmp.eq.s32.totalorder %s33, 0
      %p163 = por %p161, %p162
      %p164 = scmp.ne.s32.totalorder %s150, %s151
      %p165 = scmp.eq.s32.totalorder %s34, 3
      %p166 = por %p164, %p165
      %p168 = scmp.ne.s32.totalorder %s151, %s167
      %p169 = scmp.eq.s32.totalorder %s34, 0
      %p170 = por %p168, %p169
      %s171 = ssub.s32 %s37, %s46
      %p172 = scmp.eq.s32.totalorder %s171, 0
      %s174 = sadd.s32 %s173, 1
      %s175 = scalar_select %p172, %s173, %s174
      %p178 = pneg %p172
      %p179 = scmp.eq.s32.totalorder %s28, 3
      %p180 = por %p178, %p179
      %p181 = scmp.ne.s32.totalorder %s173, %s176
      %p182 = scmp.eq.s32.totalorder %s28, 0
      %p183 = por %p181, %p182
      %p184 = scmp.ne.s32.totalorder %s173, %s176
      %p185 = scmp.eq.s32.totalorder %s33, 3
      %p186 = por %p184, %p185
      %p187 = scmp.ne.s32.totalorder %s176, %s177
      %p188 = scmp.eq.s32.totalorder %s33, 0
      %p189 = por %p187, %p188
      %p190 = scmp.ne.s32.totalorder %s176, %s177
      %p191 = scmp.eq.s32.totalorder %s34, 3
      %p192 = por %p190, %p191
      %p194 = scmp.ne.s32.totalorder %s177, %s193
      %p195 = scmp.eq.s32.totalorder %s34, 0
      %p196 = por %p194, %p195
      %s197 = ssub.s32 %s35, %s54
      %s198 = ssub.s32 %s36, %s50
      %s199 = sor.u32 %s197, %s198
      %s200 = ssub.s32 %s37, %s46
      %s201 = sor.u32 %s199, %s200
      %p202 = scmp.eq.s32.totalorder %s201, 0
      %s204 = sadd.s32 %s203, 1
      %s205 = scalar_select %p202, %s203, %s204
      %p208 = pneg %p202
      %p209 = scmp.eq.s32.totalorder %s28, 3
      %p210 = por %p208, %p209
      %p211 = scmp.ne.s32.totalorder %s203, %s206
      %p212 = scmp.eq.s32.totalorder %s28, 0
      %p213 = por %p211, %p212
      %p214 = scmp.ne.s32.totalorder %s203, %s206
      %p215 = scmp.eq.s32.totalorder %s33, 3
      %p216 = por %p214, %p215
      %p217 = scmp.ne.s32.totalorder %s206, %s207
      %p218 = scmp.eq.s32.totalorder %s33, 0
      %p219 = por %p217, %p218
      %p220 = scmp.ne.s32.totalorder %s206, %s207
      %p221 = scmp.eq.s32.totalorder %s34, 3
      %p222 = por %p220, %p221
      %p224 = scmp.ne.s32.totalorder %s207, %s223
      %p225 = scmp.eq.s32.totalorder %s34, 0
      %p226 = por %p224, %p225
      %s227 = ssub.s32 %s35, %s54
      %s228 = ssub.s32 %s36, %s50
      %s229 = sor.u32 %s227, %s228
      %s230 = ssub.s32 %s37, %s46
      %s231 = sor.u32 %s229, %s230
      %p232 = scmp.eq.s32.totalorder %s231, 0
      %s234 = sadd.s32 %s233, 1
      %s235 = scalar_select %p232, %s233, %s234
      %p238 = pneg %p232
      %p239 = scmp.eq.s32.totalorder %s28, 3
      %p240 = por %p238, %p239
      %p241 = scmp.ne.s32.totalorder %s233, %s236
      %p242 = scmp.eq.s32.totalorder %s28, 0
      %p243 = por %p241, %p242
      %p244 = scmp.ne.s32.totalorder %s233, %s236
      %p245 = scmp.eq.s32.totalorder %s33, 3
      %p246 = por %p244, %p245
      %p247 = scmp.ne.s32.totalorder %s236, %s237
      %p248 = scmp.eq.s32.totalorder %s33, 0
      %p249 = por %p247, %p248
      %p250 = scmp.ne.s32.totalorder %s236, %s237
      %p251 = scmp.eq.s32.totalorder %s34, 3
      %p252 = por %p250, %p251
      %p254 = scmp.ne.s32.totalorder %s237, %s253
      %p255 = scmp.eq.s32.totalorder %s34, 0
      %p256 = por %p254, %p255
      %p257 = scmp.le.s32.totalorder 1, %s28
      %p258 = scmp.lt.s32.totalorder %s28, 5
      %p259 = pnand %p257, %p258
      %p260 = pneg %p259
      // Predicated region
      $region9: #{tpu_custom_call.1} parent=5 // pred_check
        _
      $region10: #{tpu_custom_call.1} parent=5 // pred_check_branch
        %262 = sbr.rel (%p259) target = $region12
      $region11: #{tpu_custom_call.1} parent=5 // pred_region
        %s263 = ssub.s32 %s28, 1
        // Predicated region
        $region13: #{tpu_custom_call.1} parent=11 // pred_check
          %p264 = pneg %p189
        $region14: #{tpu_custom_call.1} parent=11 // pred_check_branch
          %266 = sbr.rel (%p264) target = $region16
        $region15: #{tpu_custom_call.1} parent=11 // pred_region
          %p267 = scmp.lt.s32.totalorder %s40, 0
          %s268 = scalar_select %p267, %s40, 0
          %s269 = smul.addr %s268, 8
          %s270 = scalar_lea.vmem %s4, %s269
        $region16: #{tpu_custom_call.1} parent=11 // pred_fallthru
          _
      $region12: #{tpu_custom_call.1} parent=5 // pred_fallthru
        _
      %p271 = scmp.lt.s32.totalorder %s28, 4
      // Predicated region
      $region17: #{tpu_custom_call.1} parent=5 // pred_check
        %p272 = pneg %p271
      $region18: #{tpu_custom_call.1} parent=5 // pred_check_branch
        %274 = sbr.rel (%p272) target = $region20
      $region19: #{tpu_custom_call.1} parent=5 // pred_region
        // Predicated region
        $region21: #{tpu_custom_call.1} parent=19 // pred_check
          %p275 = pneg %p71
        $region22: #{tpu_custom_call.1} parent=19 // pred_check_branch
          %277 = sbr.rel (%p275) target = $region24
        $region23: #{tpu_custom_call.1} parent=19 // pred_region
          %s278 = sand.u32 %s61, 1
          %s279 = scalar_lea.sflag [#allocation3], %s278
          %s280 = sand.u32 %s61, 1
          %s281 = smul.addr %s280, 8
          %s282 = scalar_lea.vmem [#allocation2], %s281
          %s284 = ssub.s32 128, 128
          %285 = vsyncadd %s279, %s284
          %s286 = sadd.s32 %s37, %s36
          %s287 = smul.addr %s35, 2
          %s288 = sadd.s32 %s286, %s287
          %s289 = smul.addr %s288, 128
          %s290 = scalar_lea.hbm %s0, %s289
          %s292 = sshll.u32 %s282, 4
          %s293 = int_to_ptr.vmem [resolvable:$true] %s292
          %295 = dma.hbm_to_vmem [thread:$0]  %s290, 128, %s293, %s279
        $region24: #{tpu_custom_call.1} parent=19 // pred_fallthru
          _
        // Predicated region
        $region25: #{tpu_custom_call.1} parent=19 // pred_check
          %p296 = pneg %p99
        $region26: #{tpu_custom_call.1} parent=19 // pred_check_branch
          %298 = sbr.rel (%p296) target = $region28
        $region27: #{tpu_custom_call.1} parent=19 // pred_region
          %s299 = sand.u32 %s28, 1
          %s300 = scalar_lea.sflag [#allocation6], %s299
          %s301 = sand.u32 %s89, 1
          %s302 = smul.addr %s301, 8
          %s303 = scalar_lea.vmem [#allocation5], %s302
          %s305 = ssub.s32 128, 128
          %306 = vsyncadd %s300, %s305
          %s307 = smul.addr %s35, 2
          %s308 = sadd.s32 %s36, %s307
          %s309 = smul.addr %s308, 128
          %s310 = scalar_lea.hbm %s1, %s309
          %s312 = sshll.u32 %s303, 4
          %s313 = int_to_ptr.vmem [resolvable:$true] %s312
          %315 = dma.hbm_to_vmem [thread:$0]  %s310, 128, %s313, %s300
        $region28: #{tpu_custom_call.1} parent=19 // pred_fallthru
          _
        // Predicated region
        $region29: #{tpu_custom_call.1} parent=19 // pred_check
          %p316 = pneg %p127
        $region30: #{tpu_custom_call.1} parent=19 // pred_check_branch
          %318 = sbr.rel (%p316) target = $region32
        $region31: #{tpu_custom_call.1} parent=19 // pred_region
          %s319 = sand.u32 %s28, 1
          %s320 = scalar_lea.sflag [#allocation6], %s319
          %s321 = sand.u32 %s117, 1
          %s322 = smul.addr %s321, 8
          %s323 = scalar_lea.vmem [#allocation7], %s322
          %s325 = ssub.s32 128, 128
          %326 = vsyncadd %s320, %s325
          %s327 = smul.addr %s35, 2
          %s328 = sadd.s32 %s36, %s327
          %s329 = smul.addr %s328, 128
          %s330 = scalar_lea.hbm %s2, %s329
          %s332 = sshll.u32 %s323, 4
          %s333 = int_to_ptr.vmem [resolvable:$true] %s332
          %335 = dma.hbm_to_vmem [thread:$0]  %s330, 128, %s333, %s320
        $region32: #{tpu_custom_call.1} parent=19 // pred_fallthru
          _
        // Predicated region
        $region33: #{tpu_custom_call.1} parent=19 // pred_check
          %p336 = pneg %p157
        $region34: #{tpu_custom_call.1} parent=19 // pred_check_branch
          %338 = sbr.rel (%p336) target = $region36
        $region35: #{tpu_custom_call.1} parent=19 // pred_region
          %s339 = sand.u32 %s147, 1
          %s340 = scalar_lea.sflag [#allocation9], %s339
          %s341 = sand.u32 %s147, 1
          %s342 = smul.addr %s341, 4
          %s343 = scalar_lea.vmem [#allocation8], %s342
          %s345 = ssub.s32 64, 64
          %346 = vsyncadd %s340, %s345
          %s347 = smul.addr %s36, 2
          %s348 = sadd.s32 %s37, %s347
          %s349 = smul.addr %s35, 4
          %s350 = sadd.s32 %s348, %s349
          %s351 = smul.addr %s350, 32
          %s352 = scalar_lea.hbm %s3, %s351
          %s353 = sshll.u32 %s343, 4
          %s354 = int_to_ptr.vmem [resolvable:$true] %s353
          %359 = dma.hbm_to_vmem [thread:$0]  %s352, 64, %s354, %s340, 32, 32, 2
        $region36: #{tpu_custom_call.1} parent=19 // pred_fallthru
          _
      $region20: #{tpu_custom_call.1} parent=5 // pred_fallthru
        _
      %p360 = scmp.le.s32.totalorder 1, %s28
      %p361 = scmp.lt.s32.totalorder %s28, 5
      %p362 = pnand %p360, %p361
      %p363 = pneg %p362
      // Predicated region
      $region37: #{tpu_custom_call.1} parent=5 // pred_check
        _
      $region38: #{tpu_custom_call.1} parent=5 // pred_check_branch
        %365 = sbr.rel (%p362) target = $region40
      $region39: #{tpu_custom_call.1} parent=5 // pred_region
        %s366 = ssub.s32 %s28, 1
        %s367 = sand.u32 %s64, 1
        %s368 = scalar_lea.sflag [#allocation3], %s367
        %s369 = sand.u32 %s64, 1
        %s370 = smul.addr %s369, 8
        %s371 = scalar_lea.vmem [#allocation2], %s370
        // Predicated region
        $region41: #{tpu_custom_call.1} parent=39 // pred_check
          %p372 = pneg %p77
        $region42: #{tpu_custom_call.1} parent=39 // pred_check_branch
          %374 = sbr.rel (%p372) target = $region44
        $region43: #{tpu_custom_call.1} parent=39 // pred_region
          %375 = dma.done %s368, 128
        $region44: #{tpu_custom_call.1} parent=39 // pred_fallthru
          _
        %s376 = sand.u32 %s33, 1
        %s377 = scalar_lea.sflag [#allocation6], %s376
        %s378 = sand.u32 %s92, 1
        %s379 = smul.addr %s378, 8
        %s380 = scalar_lea.vmem [#allocation5], %s379
        // Predicated region
        $region45: #{tpu_custom_call.1} parent=39 // pred_check
          %p381 = pneg %p105
        $region46: #{tpu_custom_call.1} parent=39 // pred_check_branch
          %383 = sbr.rel (%p381) target = $region48
        $region47: #{tpu_custom_call.1} parent=39 // pred_region
          %384 = dma.done %s377, 128
        $region48: #{tpu_custom_call.1} parent=39 // pred_fallthru
          _
        %s385 = sand.u32 %s33, 1
        %s386 = scalar_lea.sflag [#allocation6], %s385
        %s387 = sand.u32 %s120, 1
        %s388 = smul.addr %s387, 8
        %s389 = scalar_lea.vmem [#allocation7], %s388
        // Predicated region
        $region49: #{tpu_custom_call.1} parent=39 // pred_check
          %p390 = pneg %p133
        $region50: #{tpu_custom_call.1} parent=39 // pred_check_branch
          %392 = sbr.rel (%p390) target = $region52
        $region51: #{tpu_custom_call.1} parent=39 // pred_region
          %393 = dma.done %s386, 128
        $region52: #{tpu_custom_call.1} parent=39 // pred_fallthru
          _
        %s394 = sand.u32 %s150, 1
        %s395 = scalar_lea.sflag [#allocation9], %s394
        %s396 = sand.u32 %s150, 1
        %s397 = smul.addr %s396, 4
        %s398 = scalar_lea.vmem [#allocation8], %s397
        // Predicated region
        $region53: #{tpu_custom_call.1} parent=39 // pred_check
          %p399 = pneg %p163
        $region54: #{tpu_custom_call.1} parent=39 // pred_check_branch
          %401 = sbr.rel (%p399) target = $region56
        $region55: #{tpu_custom_call.1} parent=39 // pred_region
          %402 = dma.done %s395, 64
        $region56: #{tpu_custom_call.1} parent=39 // pred_fallthru
          _
        %s403 = sand.u32 %s64, 1
        %s404 = scalar_lea.sflag [#allocation3], %s403
        %s405 = sand.u32 %s64, 1
        %s406 = smul.addr %s405, 8
        %s407 = scalar_lea.vmem [#allocation2], %s406
        %p408 = pneg %p77
        %p409 = pneg %p74
        %s410 = sand.u32 %s33, 1
        %s411 = scalar_lea.sflag [#allocation6], %s410
        %s412 = sand.u32 %s92, 1
        %s413 = smul.addr %s412, 8
        %s414 = scalar_lea.vmem [#allocation5], %s413
        %p415 = pneg %p105
        %p416 = pneg %p102
        %s417 = sand.u32 %s33, 1
        %s418 = scalar_lea.sflag [#allocation6], %s417
        %s419 = sand.u32 %s120, 1
        %s420 = smul.addr %s419, 8
        %s421 = scalar_lea.vmem [#allocation7], %s420
        %p422 = pneg %p133
        %p423 = pneg %p130
        %s424 = sand.u32 %s150, 1
        %s425 = scalar_lea.sflag [#allocation9], %s424
        %s426 = sand.u32 %s150, 1
        %s427 = smul.addr %s426, 4
        %s428 = scalar_lea.vmem [#allocation8], %s427
        %p429 = pneg %p163
        %p430 = pneg %p160
        %p431 = scmp.lt.s32.totalorder %s40, 0
        %s432 = scalar_select %p431, %s40, 0
        %s433 = smul.addr %s432, 8
        %s434 = scalar_lea.vmem %s4, %s433
        %p435 = pneg %p189
        %p436 = pneg %p186
        %p437 = pneg %p219
        %p438 = pneg %p216
        %s439 = sand.u32 %s206, 1
        %s440 = scalar_lea.sflag [#allocation4], %s439
        %s441 = sand.u32 %s206, 1
        %s442 = smul.addr %s441, 16
        %s443 = scalar_lea.vmem [#allocation10], %s442
        %p444 = pneg %p249
        %p445 = pneg %p246
        %s446 = sand.u32 %s236, 1
        %s447 = scalar_lea.sflag [#allocation12], %s446
        %s448 = sand.u32 %s236, 1
        %s449 = smul.addr %s448, 8
        %s450 = scalar_lea.vmem [#allocation11], %s449
        %p451 = scmp.lt.s32.totalorder %s40, 0
        %s452 = scalar_select %p451, %s40, 0
        %s453 = smul.addr %s452, 8
        %s454 = scalar_lea.vmem %s4, %s453
        %v457 = vld [vmem:[%s371] sm:$0xff]
        %v458 = vmul.f32 %v457, 0.25
        %v459 = vld [vmem:[%s380] sm:$0xff]
        %v460 = vld [vmem:[%s389] sm:$0xff]
        %v461 = vld [vmem:[%s454] sm:$0xff]
        %v462 = vlaneseq
        %v463 = vshrl.u32 %v462, 7
        %s464 = smul.u32 %s40, 8
        %v465 = vstv %s464
        %v466 = vadd.s32 %v463, %v465
        %v467 = vlaneseq
        %v468 = vand.u32 %v467, 127
        %vm469 = vcmp.eq.s32.totalorder %v466, %v468
        %vm470 = vcmp.gt.f32.partialorder %v461, 0.5
        %v471 = vsel %vm470, 1, 0
        %472 = vset.pattern.permute.xlu0 0
        %473 = vperm.xlu0 %472, %v471
        %v474 = vpop.permute.xlu0 %473
        %vm475 = vcmp.eq.s32.totalorder %v474, 1
        %vm476 = vmand %vm469, %vm475
        %v477 = vld [vmem:[%s398] sm:$0x3]
        %vm478 = vcmask 130048
        %v480 = vsel %vm478, %v458, 0
        %v483 = vsel %vm478, %v459, 0
        %485 = vmatprep.subr.mxu0 0.0
        %486 = vmatpush1.xpose.msra.mxu0 0.0
        %487 = vmatprep.subr.mxu0 0.0
        %488 = vmatpush1.xpose.msra.mxu0 0.0
        %489 = vmatprep.subr.mxu0 0.0
        %490 = vmatpush1.xpose.msra.mxu0 0.0
        %491 = vmatprep.subr.mxu0 0.0
        %492 = vmatpush1.xpose.msra.mxu0 0.0
        %493 = vmatprep.subr.mxu0 0.0
        %494 = vmatpush1.xpose.msra.mxu0 0.0
        %495 = vmatprep.subr.mxu0 0.0
        %496 = vmatpush1.xpose.msra.mxu0 0.0
        %497 = vmatprep.subr.mxu0 0.0
        %498 = vmatpush1.xpose.msra.mxu0 0.0
        %499 = vmatprep.subr.mxu0 0.0
        %500 = vmatpush1.xpose.msra.mxu0 0.0
        %501 = vmatprep.subr.mxu0 0.0
        %502 = vmatpush1.xpose.msra.mxu0 0.0
        %503 = vmatprep.subr.mxu0 0.0
        %504 = vmatpush1.xpose.msra.mxu0 0.0
        %505 = vmatprep.subr.mxu0 0.0
        %506 = vmatpush1.xpose.msra.mxu0 0.0
        %507 = vmatprep.subr.mxu0 0.0
        %508 = vmatpush1.xpose.msra.mxu0 0.0
        %509 = vmatprep.subr.mxu0 0.0
        %510 = vmatpush1.xpose.msra.mxu0 0.0
        %511 = vmatprep.subr.mxu0 0.0
        %512 = vmatpush1.xpose.msra.mxu0 0.0
        %513 = vmatprep.subr.mxu0 0.0
        %514 = vmatpush1.xpose.msra.mxu0 0.0
        %515 = vmatprep.subr.mxu0 0.0
        %516 = vmatpush1.xpose.msra.mxu0 %v483
        %517 = vmatprep.subr.mxu0 0.0
        %518 = vmatpush2.xpose.msra.mxu0 0.0
        %519 = vmatprep.subr.mxu0 0.0
        %520 = vmatpush2.xpose.msra.mxu0 0.0
        %521 = vmatprep.subr.mxu0 0.0
        %522 = vmatpush2.xpose.msra.mxu0 0.0
        %523 = vmatprep.subr.mxu0 0.0
        %524 = vmatpush2.xpose.msra.mxu0 0.0
        %525 = vmatprep.subr.mxu0 0.0
        %526 = vmatpush2.xpose.msra.mxu0 0.0
        %527 = vmatprep.subr.mxu0 0.0
        %528 = vmatpush2.xpose.msra.mxu0 0.0
        %529 = vmatprep.subr.mxu0 0.0
        %530 = vmatpush2.xpose.msra.mxu0 0.0
        %531 = vmatprep.subr.mxu0 0.0
        %532 = vmatpush2.xpose.msra.mxu0 0.0
        %533 = vmatprep.subr.mxu0 0.0
        %534 = vmatpush2.xpose.msra.mxu0 0.0
        %535 = vmatprep.subr.mxu0 0.0
        %536 = vmatpush2.xpose.msra.mxu0 0.0
        %537 = vmatprep.subr.mxu0 0.0
        %538 = vmatpush2.xpose.msra.mxu0 0.0
        %539 = vmatprep.subr.mxu0 0.0
        %540 = vmatpush2.xpose.msra.mxu0 0.0
        %541 = vmatprep.subr.mxu0 0.0
        %542 = vmatpush2.xpose.msra.mxu0 0.0
        %543 = vmatprep.subr.mxu0 0.0
        %544 = vmatpush2.xpose.msra.mxu0 0.0
        %545 = vmatprep.subr.mxu0 0.0
        %546 = vmatpush2.xpose.msra.mxu0 0.0
        %547 = vmatprep.subr.mxu0 0.0
        %548 = vmatpush2.xpose.msra.mxu0 0.0
        %549 = vmatprep.mubr.f32.mxu0 0.0
        %550 = vmatmul.mubr.f32.gmra.mxu0 %v480
        %v551 = vpop.f32.mrf.mxu0
        %v552 = vadd.f32 0.0, %v551
        %v553 = vpop.f32.mrf.mxu0
        %554 = vdwg.mxu0
        %vm555 = vnez %v477
        %v556 = vsel %vm555, 16843009, 0
        %v557 = vunpack.c.0.s8 %v556
        %vm558 = vcmp.ne.s32.totalorder %v557, 0
        %v559 = vsel %vm558, -inf, %v552
        %v560 = vsel %vm476, 0.25, %v559
        %vm561 = vcmask 64512
        %v562 = vsel %vm561, %v560, -inf
        %563 = vmax.xlane.f32.xlu0 %v562
        %v564 = vpop.xlane.xlu0 %563
        %v565 = vsub.f32 %v560, %v564
        %v566 = vmul.f32 %v565, 1.442695
        %v567 = vpow.pop %v566
        %v568 = vsel %vm561, %v567, 0.0
        %569 = vadd.xlane.f32.xlu0 %v568
        %v570 = vpop.xlane.xlu0 %569
        %v571 = vrcp.pop %v570
        %v572 = vmul.f32 %v567, %v571
        %573 = vst.msk [vmem:[%s443] sm:$0xff] %vm561, %v572
        %v575 = vsel %vm561, %v572, 0
        %577 = vmatprep.subr.mxu0 0.0
        %578 = vmatpush1.msra.mxu0 0.0
        %579 = vmatprep.subr.mxu0 0.0
        %580 = vmatpush1.msra.mxu0 0.0
        %581 = vmatprep.subr.mxu0 0.0
        %582 = vmatpush1.msra.mxu0 0.0
        %583 = vmatprep.subr.mxu0 0.0
        %584 = vmatpush1.msra.mxu0 0.0
        %585 = vmatprep.subr.mxu0 0.0
        %586 = vmatpush1.msra.mxu0 0.0
        %587 = vmatprep.subr.mxu0 0.0
        %588 = vmatpush1.msra.mxu0 0.0
        %589 = vmatprep.subr.mxu0 0.0
        %590 = vmatpush1.msra.mxu0 0.0
        %591 = vmatprep.subr.mxu0 0.0
        %592 = vmatpush1.msra.mxu0 0.0
        %593 = vmatprep.subr.mxu0 0.0
        %594 = vmatpush1.msra.mxu0 0.0
        %595 = vmatprep.subr.mxu0 0.0
        %596 = vmatpush1.msra.mxu0 0.0
        %597 = vmatprep.subr.mxu0 0.0
        %598 = vmatpush1.msra.mxu0 0.0
        %599 = vmatprep.subr.mxu0 0.0
        %600 = vmatpush1.msra.mxu0 0.0
        %601 = vmatprep.subr.mxu0 0.0
        %602 = vmatpush1.msra.mxu0 0.0
        %603 = vmatprep.subr.mxu0 0.0
        %604 = vmatpush1.msra.mxu0 0.0
        %605 = vmatprep.subr.mxu0 0.0
        %606 = vmatpush1.msra.mxu0 0.0
        %607 = vmatprep.subr.mxu0 0.0
        %608 = vmatpush1.msra.mxu0 %v460
        %609 = vmatprep.subr.mxu0 0.0
        %610 = vmatpush2.msra.mxu0 0.0
        %611 = vmatprep.subr.mxu0 0.0
        %612 = vmatpush2.msra.mxu0 0.0
        %613 = vmatprep.subr.mxu0 0.0
        %614 = vmatpush2.msra.mxu0 0.0
        %615 = vmatprep.subr.mxu0 0.0
        %616 = vmatpush2.msra.mxu0 0.0
        %617 = vmatprep.subr.mxu0 0.0
        %618 = vmatpush2.msra.mxu0 0.0
        %619 = vmatprep.subr.mxu0 0.0
        %620 = vmatpush2.msra.mxu0 0.0
        %621 = vmatprep.subr.mxu0 0.0
        %622 = vmatpush2.msra.mxu0 0.0
        %623 = vmatprep.subr.mxu0 0.0
        %624 = vmatpush2.msra.mxu0 0.0
        %625 = vmatprep.subr.mxu0 0.0
        %626 = vmatpush2.msra.mxu0 0.0
        %627 = vmatprep.subr.mxu0 0.0
        %628 = vmatpush2.msra.mxu0 0.0
        %629 = vmatprep.subr.mxu0 0.0
        %630 = vmatpush2.msra.mxu0 0.0
        %631 = vmatprep.subr.mxu0 0.0
        %632 = vmatpush2.msra.mxu0 0.0
        %633 = vmatprep.subr.mxu0 0.0
        %634 = vmatpush2.msra.mxu0 0.0
        %635 = vmatprep.subr.mxu0 0.0
        %636 = vmatpush2.msra.mxu0 0.0
        %637 = vmatprep.subr.mxu0 0.0
        %638 = vmatpush2.msra.mxu0 0.0
        %639 = vmatprep.subr.mxu0 0.0
        %640 = vmatpush2.msra.mxu0 0.0
        %641 = vmatprep.mubr.f32.mxu0 0.0
        %642 = vmatmul.mubr.f32.gmra.mxu0 %v575
        %v643 = vpop.f32.mrf.mxu0
        %v644 = vadd.f32 0.0, %v643
        %v645 = vpop.f32.mrf.mxu0
        %646 = vdwg.mxu0
        %s647 = scalar_lea.vmem %s398, 2 [#allocation8]
        %v648 = vld [vmem:[%s647] sm:$0x3]
        %649 = vrot.lane.b32.xlu0 %v458, 112
        %v650 = vpop.permute.xlu0 %649
        %651 = vrot.lane.b32.xlu0 %v459, 112
        %v652 = vpop.permute.xlu0 %651
        %v653 = vsel %vm478, %v650, 0
        %v655 = vsel %vm478, %v652, 0
        %657 = vmatprep.subr.mxu0 0.0
        %658 = vmatpush1.xpose.msra.mxu0 0.0
        %659 = vmatprep.subr.mxu0 0.0
        %660 = vmatpush1.xpose.msra.mxu0 0.0
        %661 = vmatprep.subr.mxu0 0.0
        %662 = vmatpush1.xpose.msra.mxu0 0.0
        %663 = vmatprep.subr.mxu0 0.0
        %664 = vmatpush1.xpose.msra.mxu0 0.0
        %665 = vmatprep.subr.mxu0 0.0
        %666 = vmatpush1.xpose.msra.mxu0 0.0
        %667 = vmatprep.subr.mxu0 0.0
        %668 = vmatpush1.xpose.msra.mxu0 0.0
        %669 = vmatprep.subr.mxu0 0.0
        %670 = vmatpush1.xpose.msra.mxu0 0.0
        %671 = vmatprep.subr.mxu0 0.0
        %672 = vmatpush1.xpose.msra.mxu0 0.0
        %673 = vmatprep.subr.mxu0 0.0
        %674 = vmatpush1.xpose.msra.mxu0 0.0
        %675 = vmatprep.subr.mxu0 0.0
        %676 = vmatpush1.xpose.msra.mxu0 0.0
        %677 = vmatprep.subr.mxu0 0.0
        %678 = vmatpush1.xpose.msra.mxu0 0.0
        %679 = vmatprep.subr.mxu0 0.0
        %680 = vmatpush1.xpose.msra.mxu0 0.0
        %681 = vmatprep.subr.mxu0 0.0
        %682 = vmatpush1.xpose.msra.mxu0 0.0
        %683 = vmatprep.subr.mxu0 0.0
        %684 = vmatpush1.xpose.msra.mxu0 0.0
        %685 = vmatprep.subr.mxu0 0.0
        %686 = vmatpush1.xpose.msra.mxu0 0.0
        %687 = vmatprep.subr.mxu0 0.0
        %688 = vmatpush1.xpose.msra.mxu0 %v655
        %689 = vmatprep.subr.mxu0 0.0
        %690 = vmatpush2.xpose.msra.mxu0 0.0
        %691 = vmatprep.subr.mxu0 0.0
        %692 = vmatpush2.xpose.msra.mxu0 0.0
        %693 = vmatprep.subr.mxu0 0.0
        %694 = vmatpush2.xpose.msra.mxu0 0.0
        %695 = vmatprep.subr.mxu0 0.0
        %696 = vmatpush2.xpose.msra.mxu0 0.0
        %697 = vmatprep.subr.mxu0 0.0
        %698 = vmatpush2.xpose.msra.mxu0 0.0
        %699 = vmatprep.subr.mxu0 0.0
        %700 = vmatpush2.xpose.msra.mxu0 0.0
        %701 = vmatprep.subr.mxu0 0.0
        %702 = vmatpush2.xpose.msra.mxu0 0.0
        %703 = vmatprep.subr.mxu0 0.0
        %704 = vmatpush2.xpose.msra.mxu0 0.0
        %705 = vmatprep.subr.mxu0 0.0
        %706 = vmatpush2.xpose.msra.mxu0 0.0
        %707 = vmatprep.subr.mxu0 0.0
        %708 = vmatpush2.xpose.msra.mxu0 0.0
        %709 = vmatprep.subr.mxu0 0.0
        %710 = vmatpush2.xpose.msra.mxu0 0.0
        %711 = vmatprep.subr.mxu0 0.0
        %712 = vmatpush2.xpose.msra.mxu0 0.0
        %713 = vmatprep.subr.mxu0 0.0
        %714 = vmatpush2.xpose.msra.mxu0 0.0
        %715 = vmatprep.subr.mxu0 0.0
        %716 = vmatpush2.xpose.msra.mxu0 0.0
        %717 = vmatprep.subr.mxu0 0.0
        %718 = vmatpush2.xpose.msra.mxu0 0.0
        %719 = vmatprep.subr.mxu0 0.0
        %720 = vmatpush2.xpose.msra.mxu0 0.0
        %721 = vmatprep.mubr.f32.mxu0 0.0
        %722 = vmatmul.mubr.f32.gmra.mxu0 %v653
        %v723 = vpop.f32.mrf.mxu0
        %v724 = vadd.f32 0.0, %v723
        %v725 = vpop.f32.mrf.mxu0
        %726 = vdwg.mxu0
        %vm727 = vnez %v648
        %v728 = vsel %vm727, 16843009, 0
        %v729 = vunpack.c.0.s8 %v728
        %vm730 = vcmp.ne.s32.totalorder %v729, 0
        %v731 = vsel %vm730, -inf, %v724
        %v732 = vsel %vm476, 0.25, %v731
        %v733 = vsel %vm561, %v732, -inf
        %734 = vmax.xlane.f32.xlu0 %v733
        %v735 = vpop.xlane.xlu0 %734
        %v736 = vsub.f32 %v732, %v735
        %v737 = vmul.f32 %v736, 1.442695
        %v738 = vpow.pop %v737
        %v739 = vsel %vm561, %v738, 0.0
        %740 = vadd.xlane.f32.xlu0 %v739
        %v741 = vpop.xlane.xlu0 %740
        %v742 = vrcp.pop %v741
        %v743 = vmul.f32 %v738, %v742
        %s744 = scalar_lea.vmem %s443, 8 [#allocation10]
        %745 = vst.msk [vmem:[%s744] sm:$0xff] %vm561, %v743
        %747 = vrot.lane.b32.xlu0 %v460, 112
        %v748 = vpop.permute.xlu0 %747
        %v751 = vsel %vm561, %v743, 0
        %753 = vmatprep.subr.mxu0 0.0
        %754 = vmatpush1.msra.mxu0 0.0
        %755 = vmatprep.subr.mxu0 0.0
        %756 = vmatpush1.msra.mxu0 0.0
        %757 = vmatprep.subr.mxu0 0.0
        %758 = vmatpush1.msra.mxu0 0.0
        %759 = vmatprep.subr.mxu0 0.0
        %760 = vmatpush1.msra.mxu0 0.0
        %761 = vmatprep.subr.mxu0 0.0
        %762 = vmatpush1.msra.mxu0 0.0
        %763 = vmatprep.subr.mxu0 0.0
        %764 = vmatpush1.msra.mxu0 0.0
        %765 = vmatprep.subr.mxu0 0.0
        %766 = vmatpush1.msra.mxu0 0.0
        %767 = vmatprep.subr.mxu0 0.0
        %768 = vmatpush1.msra.mxu0 0.0
        %769 = vmatprep.subr.mxu0 0.0
        %770 = vmatpush1.msra.mxu0 0.0
        %771 = vmatprep.subr.mxu0 0.0
        %772 = vmatpush1.msra.mxu0 0.0
        %773 = vmatprep.subr.mxu0 0.0
        %774 = vmatpush1.msra.mxu0 0.0
        %775 = vmatprep.subr.mxu0 0.0
        %776 = vmatpush1.msra.mxu0 0.0
        %777 = vmatprep.subr.mxu0 0.0
        %778 = vmatpush1.msra.mxu0 0.0
        %779 = vmatprep.subr.mxu0 0.0
        %780 = vmatpush1.msra.mxu0 0.0
        %781 = vmatprep.subr.mxu0 0.0
        %782 = vmatpush1.msra.mxu0 0.0
        %783 = vmatprep.subr.mxu0 0.0
        %784 = vmatpush1.msra.mxu0 %v748
        %785 = vmatprep.subr.mxu0 0.0
        %786 = vmatpush2.msra.mxu0 0.0
        %787 = vmatprep.subr.mxu0 0.0
        %788 = vmatpush2.msra.mxu0 0.0
        %789 = vmatprep.subr.mxu0 0.0
        %790 = vmatpush2.msra.mxu0 0.0
        %791 = vmatprep.subr.mxu0 0.0
        %792 = vmatpush2.msra.mxu0 0.0
        %793 = vmatprep.subr.mxu0 0.0
        %794 = vmatpush2.msra.mxu0 0.0
        %795 = vmatprep.subr.mxu0 0.0
        %796 = vmatpush2.msra.mxu0 0.0
        %797 = vmatprep.subr.mxu0 0.0
        %798 = vmatpush2.msra.mxu0 0.0
        %799 = vmatprep.subr.mxu0 0.0
        %800 = vmatpush2.msra.mxu0 0.0
        %801 = vmatprep.subr.mxu0 0.0
        %802 = vmatpush2.msra.mxu0 0.0
        %803 = vmatprep.subr.mxu0 0.0
        %804 = vmatpush2.msra.mxu0 0.0
        %805 = vmatprep.subr.mxu0 0.0
        %806 = vmatpush2.msra.mxu0 0.0
        %807 = vmatprep.subr.mxu0 0.0
        %808 = vmatpush2.msra.mxu0 0.0
        %809 = vmatprep.subr.mxu0 0.0
        %810 = vmatpush2.msra.mxu0 0.0
        %811 = vmatprep.subr.mxu0 0.0
        %812 = vmatpush2.msra.mxu0 0.0
        %813 = vmatprep.subr.mxu0 0.0
        %814 = vmatpush2.msra.mxu0 0.0
        %815 = vmatprep.subr.mxu0 0.0
        %816 = vmatpush2.msra.mxu0 0.0
        %817 = vmatprep.mubr.f32.mxu0 0.0
        %818 = vmatmul.mubr.f32.gmra.mxu0 %v751
        %v819 = vpop.f32.mrf.mxu0
        %v820 = vadd.f32 0.0, %v819
        %v821 = vpop.f32.mrf.mxu0
        %822 = vdwg.mxu0
        %824 = vrot.lane.b32.xlu0 %v820, 16
        %v825 = vpop.permute.xlu0 %824
        %v827 = vsel %vm478, %v644, %v825
        %vm828 = vcmask 261120
        %829 = vst.msk [vmem:[%s450] sm:$0xff] %vm828, %v827
        %s830 = sand.u32 %s206, 1
        %s831 = scalar_lea.sflag [#allocation4], %s830
        %s832 = sand.u32 %s206, 1
        %s833 = smul.addr %s832, 16
        %s834 = scalar_lea.vmem [#allocation10], %s833
        %s835 = sand.u32 %s236, 1
        %s836 = scalar_lea.sflag [#allocation12], %s835
        %s837 = sand.u32 %s236, 1
        %s838 = smul.addr %s837, 8
        %s839 = scalar_lea.vmem [#allocation11], %s838
        // Predicated region
        $region57: #{tpu_custom_call.1} parent=39 // pred_check
          %p840 = pneg %p216
        $region58: #{tpu_custom_call.1} parent=39 // pred_check_branch
          %842 = sbr.rel (%p840) target = $region60
        $region59: #{tpu_custom_call.1} parent=39 // pred_region
          %s844 = ssub.s32 256, 256
          %845 = vsyncadd %s831, %s844
          %s846 = smul.addr %s39, 2
          %s847 = sadd.s32 %s40, %s846
          %s848 = smul.addr %s38, 4
          %s849 = sadd.s32 %s847, %s848
          %s850 = smul.addr %s849, 128
          %s851 = scalar_lea.hbm %s5, %s850
          %s852 = sshll.u32 %s834, 4
          %s853 = int_to_ptr.vmem [resolvable:$true] %s852
          %858 = dma.vmem_to_hbm [thread:$0]  %s853, 256, %s851, %s831, 128, 128, 8
        $region60: #{tpu_custom_call.1} parent=39 // pred_fallthru
          _
        // Predicated region
        $region61: #{tpu_custom_call.1} parent=39 // pred_check
          %p859 = pneg %p246
        $region62: #{tpu_custom_call.1} parent=39 // pred_check_branch
          %861 = sbr.rel (%p859) target = $region64
        $region63: #{tpu_custom_call.1} parent=39 // pred_region
          %s863 = ssub.s32 128, 128
          %864 = vsyncadd %s836, %s863
          %s865 = sadd.s32 %s40, %s39
          %s866 = smul.addr %s38, 2
          %s867 = sadd.s32 %s865, %s866
          %s868 = smul.addr %s867, 128
          %s869 = scalar_lea.hbm %s6, %s868
          %s871 = sshll.u32 %s839, 4
          %s872 = int_to_ptr.vmem [resolvable:$true] %s871
          %874 = dma.vmem_to_hbm [thread:$0]  %s872, 128, %s869, %s836
        $region64: #{tpu_custom_call.1} parent=39 // pred_fallthru
          _
      $region40: #{tpu_custom_call.1} parent=5 // pred_fallthru
        _
      %p875 = scmp.le.s32.totalorder 2, %s28
      // Predicated region
      $region65: #{tpu_custom_call.1} parent=5 // pred_check
        %p876 = pneg %p875
      $region66: #{tpu_custom_call.1} parent=5 // pred_check_branch
        %878 = sbr.rel (%p876) target = $region68
      $region67: #{tpu_custom_call.1} parent=5 // pred_region
        %s879 = ssub.s32 %s28, 2
        // Predicated region
        $region69: #{tpu_custom_call.1} parent=67 // pred_check
          %p880 = pneg %p222
        $region70: #{tpu_custom_call.1} parent=67 // pred_check_branch
          %882 = sbr.rel (%p880) target = $region72
        $region71: #{tpu_custom_call.1} parent=67 // pred_region
          %s883 = sand.u32 %s207, 1
          %s884 = scalar_lea.sflag [#allocation4], %s883
          %s885 = sand.u32 %s207, 1
          %s886 = smul.addr %s885, 16
          %s887 = scalar_lea.vmem [#allocation10], %s886
          %888 = dma.done %s884, 256
        $region72: #{tpu_custom_call.1} parent=67 // pred_fallthru
          _
        // Predicated region
        $region73: #{tpu_custom_call.1} parent=67 // pred_check
          %p889 = pneg %p252
        $region74: #{tpu_custom_call.1} parent=67 // pred_check_branch
          %891 = sbr.rel (%p889) target = $region76
        $region75: #{tpu_custom_call.1} parent=67 // pred_region
          %s892 = sand.u32 %s237, 1
          %s893 = scalar_lea.sflag [#allocation12], %s892
          %s894 = sand.u32 %s237, 1
          %s895 = smul.addr %s894, 8
          %s896 = scalar_lea.vmem [#allocation11], %s895
          %897 = dma.done %s893, 128
        $region76: #{tpu_custom_call.1} parent=67 // pred_fallthru
          _
      $region68: #{tpu_custom_call.1} parent=5 // pred_fallthru
        _
    $region6: #{tpu_custom_call.1} parent=1 // loop_footer
      %s32 = sadd.s32 1, %s28
    $region7: #{tpu_custom_call.1} parent=1 // loop_footer_branch
      %27 = sbr.rel target = $region3
    $region8: #{tpu_custom_call.1} parent=1 // loop_exit
      _
    %898 = vsyncpa [#allocation3], 1
    %s899 = scalar_lea.sflag [#allocation3], 1
    %900 = vsyncpa %s899, 1
    %901 = vsyncpa [#allocation6], 1
    %s902 = scalar_lea.sflag [#allocation6], 1
    %903 = vsyncpa %s902, 1
    %904 = vsyncpa [#allocation9], 1
    %s905 = scalar_lea.sflag [#allocation9], 1
    %906 = vsyncpa %s905, 1
    %907 = vsyncpa [#allocation4], 1
    %s908 = scalar_lea.sflag [#allocation4], 1
    %909 = vsyncpa %s908, 1
    %910 = vsyncpa [#allocation12], 1
    %s911 = scalar_lea.sflag [#allocation12], 1
    %912 = vsyncpa %s911, 1

</llo_original>
